<compile_context>
chip_gen: v6e
topology: v6e:2x2x1
jax: 0.10.0
libtpu: 0.0.40
codegen_flags: <defaults>
</compile_context>

<pallas_src>
import functools

import jax
import jax.numpy as jnp
from jax.experimental import pallas as pl
from jax.experimental.pallas import tpu as pltpu


def _round_up(x, m):
    return ((x + m - 1) // m) * m


def _field_sum_all_lanes(x, num_fields, embed_dim):
    """Roll-tree field reduction.

    Returns s with s[b, j] = sum_f x[b, f*embed_dim + (j % embed_dim)] for
    EVERY lane j (each field-sum is replicated num_fields times across lanes).
    Rolls are circular over the logical F*D lane axis, so this holds for any
    roll direction.  Power-of-two factors use a log tree; the rest a chain.
    """
    s = x
    span = embed_dim
    remaining = num_fields
    while remaining > 1 and remaining % 2 == 0:
        s = s + pltpu.roll(s, span, axis=1)
        span *= 2
        remaining //= 2
    if remaining > 1:
        base = s
        for g in range(1, remaining):
            s = s + pltpu.roll(base, g * span, axis=1)
    return s


def _inner_product_kernel(x_ref, o_ref, *, num_fields, embed_dim):
    # x_ref: (batch_tile, F*D) lane-dense VMEM tile ; o_ref: (batch_tile, 1)
    x = x_ref[...].astype(jnp.float32)
    sq = x * x                                            # full-lane-width VPU
    s = _field_sum_all_lanes(x, num_fields, embed_dim)    # XLU rolls + adds
    # Each field-sum appears exactly num_fields times across the F*D lanes of
    # `s`, so sum_lanes(s^2) == num_fields * sum_d (field_sum_d)^2.
    y = s * s * (0.5 / num_fields) - sq * 0.5
    o_ref[...] = jnp.sum(y, axis=1, keepdims=True).astype(o_ref.dtype)


def inner_product(x_emb, *, batch_tile=None, out_dtype=None):
    """x_emb: (B, F, D) float array -> (B, 1)."""
    B, F, D = x_emb.shape
    FD = F * D
    itemsize = jnp.dtype(x_emb.dtype).itemsize
    out_dtype = x_emb.dtype if out_dtype is None else out_dtype
    out_itemsize = jnp.dtype(out_dtype).itemsize

    # Dtype-aware sublane alignment (sub-32-bit dtypes pack along sublanes).
    align = {1: 32, 2: 16, 4: 8}.get(itemsize, 8)

    if batch_tile is None:
        target_bytes = 6 * 1024 * 1024            # ~6 MiB per input tile
        bt = target_bytes // max(1, FD * itemsize)
        bt = max(align, min(int(bt), 32 * 1024))
        bt = max(align, (bt // align) * align)
        if B >= 2 * align:
            # Keep at least two grid blocks so the "parallel" batch axis can
            # split across both TensorCores on v7x.
            bt = min(bt, _round_up(pl.cdiv(B, 2), align))
        bt = min(bt, _round_up(B, align))
        batch_tile = max(align, bt)
    assert batch_tile % align == 0, (batch_tile, align)

    grid = (pl.cdiv(B, batch_tile),)

    # Free metadata reshape (contiguous); no pad copy -- the last block may be
    # ragged and is handled by Pallas edge-block masking.
    x2d = x_emb.reshape(B, FD)

    # Raise the scoped-VMEM limit so large double-buffered tiles fit on v5e
    # (16 MiB scoped default) while staying inside v7x's 64 MiB physical VMEM.
    try:
        vmem_cap = pltpu.get_tpu_info().vmem_capacity_bytes
    except Exception:
        vmem_cap = 64 * 1024 * 1024
    vmem_limit = int(min(48 * 1024 * 1024, (vmem_cap * 3) // 4))

    out = pl.pallas_call(
        functools.partial(_inner_product_kernel, num_fields=F, embed_dim=D),
        out_shape=jax.ShapeDtypeStruct((B, 1), out_dtype),
        grid_spec=pltpu.PrefetchScalarGridSpec(
            num_scalar_prefetch=0,
            grid=grid,
            in_specs=[
                pl.BlockSpec((batch_tile, FD), lambda b: (b, 0)),
            ],
            out_specs=pl.BlockSpec((batch_tile, 1), lambda b: (b, 0)),
        ),
        compiler_params=pltpu.CompilerParams(
            dimension_semantics=("parallel",),
            vmem_limit_bytes=vmem_limit,
        ),
        cost_estimate=pl.CostEstimate(
            flops=5 * B * FD,
            transcendentals=0,
            bytes_accessed=B * FD * itemsize + B * out_itemsize,
        ),
    )(x2d)

    return out


def inner_product_ref(x_emb):
    s = jnp.sum(x_emb, axis=1)
    sum_of_square = s ** 2
    square_of_sum = jnp.sum(x_emb ** 2, axis=1)
    out = (sum_of_square - square_of_sum) / 2
    return jnp.sum(out, axis=1, keepdims=True)


if __name__ == "__main__":
    key = jax.random.PRNGKey(0)
    k1, k2, k3 = jax.random.split(key, 3)
    F, D = 4, 32

    def check(x):
        out = jax.block_until_ready(inner_product(x))
        ref = inner_product_ref(x)
        assert out.shape == (x.shape[0], 1), out.shape
        assert jnp.allclose(out, ref, atol=1e-3, rtol=1e-4), (out, ref)

    # Case 1: small shape consistent with the module (4 fields, 32-dim emb).
    check(jax.random.normal(k1, (8, F, D), dtype=jnp.float32))

    # Case 2: batch not divisible by the sublane tile -> ragged edge block
    #         (no wrapper-side padding copy).
    check(jax.random.normal(k2, (13, F, D), dtype=jnp.float32))

    # Case 3: multi-block grid (batch axis splits across TensorCores on v7x).
    check(jax.random.normal(k3, (4096, F, D), dtype=jnp.float32))

    print("KERNEL_OK")
</pallas_src>

<mosaic_0001>
module attributes {stable_mosaic.version = 11 : i64} {
  func.func @_inner_product_kernel(%arg0: i32, %arg1: memref<8x128xf32, #tpu.memory_space<vmem>>, %arg2: memref<8x1xf32, #tpu.memory_space<vmem>>) attributes {dimension_semantics = [#tpu.dimension_semantics<parallel>], iteration_bounds = array<i64: 1>, scalar_prefetch = 0 : i64, scratch_operands = 0 : i64, tpu.core_type = #tpu.core_type<tc>, window_params = [{transform_indices = @transform_0, window_bounds = array<i64: 8, 128>}, {transform_indices = @transform_1, window_bounds = array<i64: 8, 1>}]} {
    %c0 = arith.constant 0 : index
    %c0_0 = arith.constant 0 : index
    %0 = vector.load %arg1[%c0, %c0_0] : memref<8x128xf32, #tpu.memory_space<vmem>>, vector<8x128xf32>
    %1 = arith.mulf %0, %0 : vector<8x128xf32>
    %c32_i32 = arith.constant 32 : i32
    %2 = tpu.dynamic_rotate %0 by %c32_i32 dim 1 : vector<8x128xf32>, i32 -> vector<8x128xf32>
    %3 = arith.addf %0, %2 : vector<8x128xf32>
    %c64_i32 = arith.constant 64 : i32
    %4 = tpu.dynamic_rotate %3 by %c64_i32 dim 1 : vector<8x128xf32>, i32 -> vector<8x128xf32>
    %5 = arith.addf %3, %4 : vector<8x128xf32>
    %6 = arith.mulf %5, %5 : vector<8x128xf32>
    %cst = arith.constant 1.250000e-01 : f32
    %7 = vector.broadcast %cst : f32 to vector<8x128xf32>
    %8 = arith.mulf %6, %7 : vector<8x128xf32>
    %cst_1 = arith.constant 5.000000e-01 : f32
    %9 = vector.broadcast %cst_1 : f32 to vector<8x128xf32>
    %10 = arith.mulf %1, %9 : vector<8x128xf32>
    %11 = arith.subf %8, %10 : vector<8x128xf32>
    %cst_2 = arith.constant dense<0.000000e+00> : vector<8xf32>
    %12 = vector.multi_reduction <add>, %11, %cst_2 [1] : vector<8x128xf32> to vector<8xf32>
    %13 = vector.shape_cast %12 : vector<8xf32> to vector<8x1xf32>
    %c0_3 = arith.constant 0 : index
    %c0_4 = arith.constant 0 : index
    %14 = vector.load %arg2[%c0_3, %c0_4] : memref<8x1xf32, #tpu.memory_space<vmem>>, vector<8x1xf32>
    tpu.vector_store %arg2[%c0_3, %c0_4], %13 {strides = array<i32>} : memref<8x1xf32, #tpu.memory_space<vmem>>, vector<8x1xf32>,
    return
  }
  func.func @transform_0(%arg0: i32) -> (i32, i32) {
    %c0_i32 = arith.constant 0 : i32
    %c0_i32_0 = arith.constant 0 : i32
    return %arg0, %c0_i32 : i32, i32
  }
  func.func @transform_1(%arg0: i32) -> (i32, i32) {
    %c0_i32 = arith.constant 0 : i32
    %c0_i32_0 = arith.constant 0 : i32
    return %arg0, %c0_i32 : i32, i32
  }
}

</mosaic_0001>

<llo_original>
// kernel: tpu_custom_call.1
$region0: #{tpu_custom_call.1}
  #allocation0 [shape = 'u32[]', space=smem, size = 0x4, offset = 0x4, fixed_abs, tag = 'smem constant byte address 0x4 - core index']
  #allocation1 [shape = 'u32[144,128]{1,0:T(1,128)}', space=vmem, size = 0x12000, scoped, tag = 'internal scratch']
  %s0 = inlined_call_operand.hbm [shape: f32[8,128], index: 0, kind: input, shape index: {}]
  %s1 = inlined_call_operand.vmem [shape: f32[8,1], index: 1, kind: output, shape index: {}]
  %s2 = sld [smem:[#allocation0]]
  $region18: #{tpu_custom_call.1} parent=0
    _
  %s4 = ssub.s32 1, %s2
  %s5 = scalar_select 0, %s4, %s2
  $region1: #{tpu_custom_call.1} parent=0
    #allocation2 [shape = 'u8[4096]{0}', space=vmem, size = 0x1000, scoped, tag = 'input window, operand 0, single buffered']
    #allocation3 [shape = 's32[1]{0}', space=sflag, size = 0x4, scoped, tag = 'scoped memory for tpu_custom_call.1']
    %6 = vsyncpa [#allocation3], 0
    // Predicated region
    $region2: #{tpu_custom_call.1} parent=1 // pred_check
      _
    $region3: #{tpu_custom_call.1} parent=1 // pred_check_branch
      %8 = sbr.rel (0) target = $region5
    $region4: #{tpu_custom_call.1} parent=1 // pred_region
      %s10 = ssub.s32 128, 128
      %11 = vsyncadd [#allocation3], %s10
      %s13 = sshll.u32 [#allocation2], 4
      %s14 = int_to_ptr.vmem [resolvable:$true] %s13
      %16 = dma.hbm_to_vmem [thread:$0]  %s0, 128, %s14, [#allocation3]
    $region5: #{tpu_custom_call.1} parent=1 // pred_fallthru
      _
    // Predicated region
    $region6: #{tpu_custom_call.1} parent=1 // pred_check
      _
    $region7: #{tpu_custom_call.1} parent=1 // pred_check_branch
      %18 = sbr.rel (0) target = $region9
    $region8: #{tpu_custom_call.1} parent=1 // pred_region
      %19 = dma.done [#allocation3], 128
    $region9: #{tpu_custom_call.1} parent=1 // pred_fallthru
      _
    %v20 = vld [vmem:[#allocation2] sm:$0xff]
    %v21 = vmul.f32 %v20, %v20
    %22 = vrot.lane.b32.xlu0 %v20, 32
    %v23 = vpop.permute.xlu0 %22
    %v24 = vadd.f32 %v20, %v23
    %25 = vrot.lane.b32.xlu0 %v24, 64
    %v26 = vpop.permute.xlu0 %25
    %v27 = vadd.f32 %v24, %v26
    %v28 = vmul.f32 %v27, %v27
    %v29 = vmul.f32 %v28, 0.125
    %v30 = vmul.f32 %v21, 0.5
    %v31 = vsub.f32 %v29, %v30
    %32 = vadd.xlane.f32.xlu0 %v31
    %v33 = vpop.xlane.xlu0 %32
    %vm34 = vcmask 7168
    %35 = vst.msk [vmem:[%s1] sm:$0xff] %vm34, %v33
    // Predicated region
    $region10: #{tpu_custom_call.1} parent=1 // pred_check
      _
    $region11: #{tpu_custom_call.1} parent=1 // pred_check_branch
      %37 = sbr.rel (0) target = $region13
    $region12: #{tpu_custom_call.1} parent=1 // pred_region
      _
    $region13: #{tpu_custom_call.1} parent=1 // pred_fallthru
      _
    // Predicated region
    $region14: #{tpu_custom_call.1} parent=1 // pred_check
      _
    $region15: #{tpu_custom_call.1} parent=1 // pred_check_branch
      %39 = sbr.rel (0) target = $region17
    $region16: #{tpu_custom_call.1} parent=1 // pred_region
      _
    $region17: #{tpu_custom_call.1} parent=1 // pred_fallthru
      _
    %40 = vsyncpa [#allocation3], 1

</llo_original>
